<compile_context>
chip_gen: v7x
topology: tpu7x:2x2x1
jax: 0.10.0
libtpu: 0.0.40
codegen_flags: <defaults>
</compile_context>

<pallas_src>
import math

import jax
import jax.numpy as jnp
from jax import lax
from jax.experimental import pallas as pl
from jax.experimental.pallas import tpu as pltpu


def _silu(x):
    return x * lax.logistic(x)


def _round_up(x, m):
    return ((x + m - 1) // m) * m


# --------------------- kernel 1: in_proj (x||z) + SiLU ----------------------

def in_proj_kernel(x_ref, w_ref, o_ref):
    o_ref[...] = _silu(jnp.dot(x_ref[...], w_ref[...],
                               preferred_element_type=jnp.float32))


# ---------- kernel 2: fused x_proj/dt_proj + chunked selective scan ---------

def make_scan_kernel(T, N, D):
    """T: timesteps per chunk, N: d_state, D: d_inner."""
    TWO_N = 2 * N

    def scan_kernel(xf_ref, xb_ref, w_ref, a_ref, bias_ref, dD_ref,
                    yf_ref, yb_ref,
                    hf_ref, hb_ref, dA_f, dA_b, dBu_f, dBu_b):
        # xf_ref/xb_ref : (2, T, D)   chunk c / chunk NC-1-c of [row-major, col-major]
        # w_ref         : (4, D, D+2N) composed [dt | B | C] projection weights
        # a_ref         : (4, N, D)    A = -exp(A_log)
        # bias_ref/dD   : (4, 1, D)
        # yf_ref/yb_ref : (2, T, D)    outputs for dirs (0,1) / (2,3), original order
        # hf/hb_ref     : (2N, D)      carried state across chunks
        # dA_*/dBu_*    : (T, 2N, D)   per-chunk scratch (dBu_* reused as hidden states)
        c = pl.program_id(1)

        @pl.when(c == 0)
        def _():
            hf_ref[...] = jnp.zeros_like(hf_ref)
            hb_ref[...] = jnp.zeros_like(hb_ref)

        c_list = []
        u_list = []
        # Per-direction projections + L-parallel precompute of dA / dB*u.
        for k in range(4):
            src = xf_ref[k] if k < 2 else xb_ref[k - 2]               # (T, D)
            proj = jnp.dot(src, w_ref[k],
                           preferred_element_type=jnp.float32)        # (T, D+2N)
            raw = proj[:, :D] + bias_ref[k]
            delta = jnp.where(raw > 20.0, raw,
                              jnp.log1p(jnp.exp(jnp.minimum(raw, 20.0))))
            bv = proj[:, D:D + N]                                      # (T, N)
            cv = proj[:, D + N:D + TWO_N]                              # (T, N)
            dA = jnp.exp(delta[:, None, :] * a_ref[k][None])           # (T, N, D)
            dBu = bv[:, :, None] * (delta * src)[:, None, :]           # (T, N, D)
            seg = slice((k % 2) * N, (k % 2) * N + N)
            if k < 2:
                dA_f[:, seg, :] = dA
                dBu_f[:, seg, :] = dBu
            else:
                dA_b[:, seg, :] = dA
                dBu_b[:, seg, :] = dBu
            c_list.append(cv)
            u_list.append(src)

        # Recurrence over the chunk: directions 0/1 walk the chunk forwards,
        # directions 2/3 walk the same chunk backwards (index s = T-1-t).
        # dBu_* is overwritten in place with the hidden states (original order).
        def body(t, carry):
            hf, hb = carry
            s = T - 1 - t
            hf = dA_f[t] * hf + dBu_f[t]
            dBu_f[t] = hf
            hb = dA_b[s] * hb + dBu_b[s]
            dBu_b[s] = hb
            return hf, hb

        hf_fin, hb_fin = lax.fori_loop(0, T, body, (hf_ref[...], hb_ref[...]),
                                       unroll=4)
        hf_ref[...] = hf_fin
        hb_ref[...] = hb_fin

        # y = C . h + D * u, already in original (un-reversed) order.
        for k in range(4):
            seg = slice((k % 2) * N, (k % 2) * N + N)
            hs = dBu_f[:, seg, :] if k < 2 else dBu_b[:, seg, :]       # (T, N, D)
            y = jnp.sum(c_list[k][:, :, None] * hs, axis=1)            # (T, D)
            y = y + dD_ref[k] * u_list[k]
            if k == 0:
                yf_ref[0] = y
            elif k == 1:
                yf_ref[1] = y
            elif k == 2:
                yb_ref[0] = y
            else:
                yb_ref[1] = y

    return scan_kernel


# ----------------- kernel 3: LayerNorm + gate + out_proj --------------------

def out_kernel(y_ref, z_ref, g_ref, b_ref, w_ref, o_ref):
    y = y_ref[...]
    mu = jnp.mean(y, axis=-1, keepdims=True)
    var = jnp.mean(jnp.square(y - mu), axis=-1, keepdims=True)
    yn = (y - mu) * lax.rsqrt(var + 1e-5) * g_ref[...] + b_ref[...]
    o_ref[...] = jnp.dot(yn * z_ref[...], w_ref[...],
                         preferred_element_type=jnp.float32)


# ----------------------------- params / wrapper ------------------------------

def make_params(key, d_model, d_state, d_inner, dt_rank, K=4,
                dt_min=1e-3, dt_max=0.1, dt_init_floor=1e-4):
    ks = jax.random.split(key, 6)
    wx = 0.02 * jax.random.normal(ks[0], (d_model, d_inner), jnp.float32)
    wz = 0.02 * jax.random.normal(ks[1], (d_model, d_inner), jnp.float32)

    # x_proj weights: (K, dt_rank + 2*d_state, d_inner) in torch; stored transposed.
    xw = 0.02 * jax.random.normal(ks[2], (K, d_inner, dt_rank + 2 * d_state),
                                  jnp.float32)
    w_dt = xw[..., :dt_rank]                          # (K, D, R)
    w_B = xw[..., dt_rank:dt_rank + d_state]          # (K, D, N)
    w_C = xw[..., dt_rank + d_state:]                 # (K, D, N)

    # dt_proj weights / bias (SS2D.dt_init, dt_init='random').
    std = dt_rank ** -0.5
    dtw = jax.random.uniform(ks[3], (K, dt_rank, d_inner), jnp.float32,
                             minval=-std, maxval=std)
    dt = jnp.exp(jax.random.uniform(ks[4], (K, 1, d_inner), jnp.float32)
                 * (math.log(dt_max) - math.log(dt_min)) + math.log(dt_min))
    dt = jnp.maximum(dt, dt_init_floor)
    dt_bias = dt + jnp.log(-jnp.expm1(-dt))           # (K, 1, D)

    # A_logs = log(1..N) per channel; the scan consumes A = -exp(A_logs).
    a_t = -jnp.broadcast_to(
        jnp.arange(1, d_state + 1, dtype=jnp.float32)[:, None],
        (d_state, d_inner))
    a_t = jnp.broadcast_to(a_t[None], (K, d_state, d_inner))

    return dict(
        wx=wx, wz=wz, w_dt=w_dt, w_B=w_B, w_C=w_C, dtw=dtw, dt_bias=dt_bias,
        A_t=a_t, Ds=jnp.ones((K, 1, d_inner), jnp.float32),
        gamma=jnp.ones((1, d_inner), jnp.float32),
        beta=jnp.zeros((1, d_inner), jnp.float32),
        w_out=0.02 * jax.random.normal(ks[5], (d_inner, d_model), jnp.float32),
    )


def ss2d_forward(x, H, W, params, *, proj_tile=512, scan_chunk=128):
    B, L, C = x.shape
    assert L == H * W
    d_inner = params["wx"].shape[1]
    d_state = params["A_t"].shape[1]
    K = 4
    assert d_state % 8 == 0, "d_state must be a multiple of 8 (sublane tiling)"

    f32 = jnp.float32
    M = B * L

    # ---------------- in_proj (fused x||z weight) + SiLU --------------------
    w_in = jnp.concatenate([params["wx"], params["wz"]], axis=1)    # (C, 2*Di)
    TM = min(proj_tile, _round_up(M, 8))
    Mp = _round_up(M, TM)
    x2 = x.reshape(M, C).astype(f32)
    if Mp != M:
        x2 = jnp.pad(x2, ((0, Mp - M), (0, 0)))

    xz = pl.pallas_call(
        in_proj_kernel,
        out_shape=jax.ShapeDtypeStruct((Mp, 2 * d_inner), f32),
        grid=(Mp // TM,),
        in_specs=[pl.BlockSpec((TM, C), lambda i: (i, 0)),
                  pl.BlockSpec((C, 2 * d_inner), lambda i: (0, 0))],
        out_specs=pl.BlockSpec((TM, 2 * d_inner), lambda i: (i, 0)),
        compiler_params=pltpu.CompilerParams(
            dimension_semantics=("parallel",)),
    )(x2, w_in)

    x_silu = xz[:M, :d_inner]
    z_silu = xz[:M, d_inner:]

    # ------------- CrossScan: only row-major + col-major orderings ----------
    xh = x_silu.reshape(B, H, W, d_inner)
    s0 = xh.reshape(B, L, d_inner)                                   # row-major
    s1 = xh.transpose(0, 2, 1, 3).reshape(B, L, d_inner)             # col-major
    xs2 = jnp.stack([s0, s1], axis=1)                                # (B,2,L,Di)

    T = _round_up(min(scan_chunk, L), 8)
    Lp = _round_up(L, T)
    if Lp != L:
        # Zero padding is scan-safe: u=0 => B=0 and dBu=0, so the state is
        # untouched through padded steps (for both forward and reverse scans).
        xs2 = jnp.pad(xs2, ((0, 0), (0, 0), (0, Lp - L), (0, 0)))
    NC = Lp // T

    # Fold dt_proj into x_proj; concatenate [dt | B | C] into one weight.
    w_dt_full = jnp.einsum('kdr,kre->kde', params["w_dt"], params["dtw"])
    w_scan = jnp.concatenate([w_dt_full, params["w_B"], params["w_C"]],
                             axis=-1)                                # (K,Di,Di+2N)

    scan_kernel = make_scan_kernel(T, d_state, d_inner)
    chunk_f = pl.BlockSpec((None, 2, T, d_inner), lambda b, c: (b, 0, c, 0))
    chunk_b = pl.BlockSpec((None, 2, T, d_inner),
                           lambda b, c: (b, 0, NC - 1 - c, 0))
    full = lambda shape: pl.BlockSpec(shape, lambda b, c: (0,) * len(shape))
    two_n = 2 * d_state

    y_fwd, y_bwd = pl.pallas_call(
        scan_kernel,
        out_shape=(jax.ShapeDtypeStruct((B, 2, Lp, d_inner), f32),
                   jax.ShapeDtypeStruct((B, 2, Lp, d_inner), f32)),
        grid=(B, NC),
        in_specs=[chunk_f, chunk_b,
                  full((K, d_inner, d_inner + 2 * d_state)),
                  full((K, d_state, d_inner)),
                  full((K, 1, d_inner)),
                  full((K, 1, d_inner))],
        out_specs=(chunk_f, chunk_b),
        scratch_shapes=[pltpu.VMEM((two_n, d_inner), f32),      # h (dirs 0,1)
                        pltpu.VMEM((two_n, d_inner), f32),      # h (dirs 2,3)
                        pltpu.VMEM((T, two_n, d_inner), f32),   # dA fwd
                        pltpu.VMEM((T, two_n, d_inner), f32),   # dA bwd
                        pltpu.VMEM((T, two_n, d_inner), f32),   # dBu fwd / hs fwd
                        pltpu.VMEM((T, two_n, d_inner), f32)],  # dBu bwd / hs bwd
        compiler_params=pltpu.CompilerParams(
            dimension_semantics=("parallel", "arbitrary"),
            vmem_limit_bytes=56 * 1024 * 1024),                 # fits v7x's 64 MiB
    )(xs2, xs2, w_scan, params["A_t"], params["dt_bias"], params["Ds"])

    # ------------------------------ CrossMerge -------------------------------
    y_row = y_fwd[:, 0, :L] + y_bwd[:, 0, :L]
    y_col = y_fwd[:, 1, :L] + y_bwd[:, 1, :L]
    y_col = y_col.reshape(B, W, H, d_inner).transpose(0, 2, 1, 3)
    y = (y_row + y_col.reshape(B, L, d_inner)).reshape(M, d_inner)

    # ----------------- LayerNorm + gate (SiLU(z)) + out_proj -----------------
    Cp = _round_up(C, 128)                  # lane-dense output, sliced host-side
    w_out = params["w_out"]
    if Cp != C:
        w_out = jnp.pad(w_out, ((0, 0), (0, Cp - C)))
    yb, zb = y, z_silu
    if Mp != M:
        yb = jnp.pad(yb, ((0, Mp - M), (0, 0)))
        zb = jnp.pad(zb, ((0, Mp - M), (0, 0)))

    out = pl.pallas_call(
        out_kernel,
        out_shape=jax.ShapeDtypeStruct((Mp, Cp), f32),
        grid=(Mp // TM,),
        in_specs=[pl.BlockSpec((TM, d_inner), lambda i: (i, 0)),
                  pl.BlockSpec((TM, d_inner), lambda i: (i, 0)),
                  pl.BlockSpec((1, d_inner), lambda i: (0, 0)),
                  pl.BlockSpec((1, d_inner), lambda i: (0, 0)),
                  pl.BlockSpec((d_inner, Cp), lambda i: (0, 0))],
        out_specs=pl.BlockSpec((TM, Cp), lambda i: (i, 0)),
        compiler_params=pltpu.CompilerParams(
            dimension_semantics=("parallel",)),
    )(yb, zb, params["gamma"], params["beta"], w_out)

    return out[:M, :C].reshape(B, L, C)
    # TODO(synk): dropout is nn.Identity (p=0.0) and d_conv=0 (no depthwise conv)
    # in the default SS2D config, so neither needs a kernel.


# ----------------------------- pure-JAX reference ----------------------------

def ss2d_reference(x, H, W, params):
    hp = lax.Precision.HIGHEST
    B, L, C = x.shape
    D = params["wx"].shape[1]
    xf = x.astype(jnp.float32)
    xl = _silu(jnp.einsum('blc,cd->bld', xf, params["wx"], precision=hp))
    z = _silu(jnp.einsum('blc,cd->bld', xf, params["wz"], precision=hp))
    xh = xl.reshape(B, H, W, D)
    s0 = xh.reshape(B, L, D)
    s1 = xh.transpose(0, 2, 1, 3).reshape(B, L, D)
    xs = jnp.stack([s0, s1, s0[:, ::-1], s1[:, ::-1]], axis=1)        # (B,4,L,D)

    dt = jnp.einsum('bkld,kdr->bklr', xs, params["w_dt"], precision=hp)
    dt = jnp.einsum('bklr,krd->bkld', dt, params["dtw"], precision=hp)
    delta = jax.nn.softplus(dt + params["dt_bias"][None])
    Bm = jnp.einsum('bkld,kdn->bkln', xs, params["w_B"], precision=hp)
    Cm = jnp.einsum('bkld,kdn->bkln', xs, params["w_C"], precision=hp)

    dA = jnp.exp(delta[:, :, :, None, :] * params["A_t"][None, :, None])
    dBu = Bm[..., None] * (delta * xs)[:, :, :, None, :]

    def step(h, inp):
        dA_l, dBu_l = inp
        h = dA_l * h + dBu_l
        return h, h

    dA_t = jnp.moveaxis(dA, 2, 0)
    dBu_t = jnp.moveaxis(dBu, 2, 0)
    _, hs = lax.scan(step, jnp.zeros(dA_t.shape[1:], jnp.float32), (dA_t, dBu_t))
    hs = jnp.moveaxis(hs, 0, 2)                                       # (B,K,L,N,D)
    ys = jnp.einsum('bkln,bklnd->bkld', Cm, hs, precision=hp)
    ys = ys + params["Ds"][None] * xs

    y0 = ys[:, 0] + ys[:, 2, ::-1]
    y1 = ys[:, 1] + ys[:, 3, ::-1]
    y1 = y1.reshape(B, W, H, D).transpose(0, 2, 1, 3).reshape(B, L, D)
    y = y0 + y1
    mu = jnp.mean(y, axis=-1, keepdims=True)
    var = jnp.mean((y - mu) ** 2, axis=-1, keepdims=True)
    yn = (y - mu) * lax.rsqrt(var + 1e-5) * params["gamma"][0] + params["beta"][0]
    return jnp.einsum('bld,dc->blc', yn * z, params["w_out"], precision=hp)


if __name__ == "__main__":
    # Small shapes consistent with the module: d_model=32 -> dt_rank=2,
    # d_state=8, ssm_ratio=2 -> d_inner=64, spatial 8x8 -> L=64, batch=2.
    d_model, d_state, ssm_ratio = 32, 8, 2.0
    d_inner = int(ssm_ratio * d_model)
    dt_rank = math.ceil(d_model / 16)
    B, H, W = 2, 8, 8
    L = H * W

    key = jax.random.PRNGKey(0)
    kx, kp = jax.random.split(key)
    params = make_params(kp, d_model, d_state, d_inner, dt_rank)
    x = jax.random.normal(kx, (B, L, d_model), jnp.float32)

    # scan_chunk=32 -> 2 L-chunks per batch, exercising the carried-state path.
    out = ss2d_forward(x, H, W, params, proj_tile=512, scan_chunk=32)
    out = jax.block_until_ready(out)
    assert out.shape == (B, L, d_model)
    assert bool(jnp.all(jnp.isfinite(out)))

    ref = ss2d_reference(x, H, W, params)
    ref = jax.block_until_ready(ref)
    err = float(jnp.max(jnp.abs(out - ref)))
    scale = float(jnp.max(jnp.abs(ref)))
    assert err <= 5e-2 * max(scale, 1e-3), f"mismatch: err={err}, scale={scale}"

    print("KERNEL_OK")
</pallas_src>

<mosaic_0001>
module attributes {stable_mosaic.version = 11 : i64} {
  func.func @in_proj_kernel(%arg0: i32, %arg1: memref<128x32xf32, #tpu.memory_space<vmem>>, %arg2: memref<32x128xf32, #tpu.memory_space<vmem>>, %arg3: memref<128x128xf32, #tpu.memory_space<vmem>>) attributes {dimension_semantics = [#tpu.dimension_semantics<parallel>], iteration_bounds = array<i64: 1>, scalar_prefetch = 0 : i64, scratch_operands = 0 : i64, tpu.core_type = #tpu.core_type<tc>, window_params = [{transform_indices = @transform_0, window_bounds = array<i64: 128, 32>}, {pipeline_mode = #tpu.pipeline_mode<synchronous>, transform_indices = @transform_1, window_bounds = array<i64: 32, 128>}, {transform_indices = @transform_2, window_bounds = array<i64: 128, 128>}]} {
    %c0 = arith.constant 0 : index
    %c0_0 = arith.constant 0 : index
    %0 = vector.load %arg1[%c0, %c0_0] : memref<128x32xf32, #tpu.memory_space<vmem>>, vector<128x32xf32>
    %c0_1 = arith.constant 0 : index
    %c0_2 = arith.constant 0 : index
    %1 = vector.load %arg2[%c0_1, %c0_2] : memref<32x128xf32, #tpu.memory_space<vmem>>, vector<32x128xf32>
    %cst = arith.constant dense<0.000000e+00> : vector<128x128xf32>
    %2 = tpu.matmul %0, %1, %cst {dimension_numbers = #tpu.dot_dimension_numbers<[1], [0], [0], [1], [0, 0, 1, 1], [], []>} : vector<128x32xf32>, vector<32x128xf32>, vector<128x128xf32> -> vector<128x128xf32>
    %3 = arith.negf %2 : vector<128x128xf32>
    %4 = math.exp %3 : vector<128x128xf32>
    %cst_3 = arith.constant 1.000000e+00 : f32
    %5 = vector.broadcast %cst_3 : f32 to vector<128x128xf32>
    %6 = arith.addf %5, %4 : vector<128x128xf32>
    %7 = arith.divf %5, %6 : vector<128x128xf32>
    %8 = arith.mulf %2, %7 : vector<128x128xf32>
    %c0_4 = arith.constant 0 : index
    %c0_5 = arith.constant 0 : index
    %9 = vector.load %arg3[%c0_4, %c0_5] : memref<128x128xf32, #tpu.memory_space<vmem>>, vector<128x128xf32>
    tpu.vector_store %arg3[%c0_4, %c0_5], %8 {strides = array<i32>} : memref<128x128xf32, #tpu.memory_space<vmem>>, vector<128x128xf32>,
    return
  }
  func.func @transform_0(%arg0: i32) -> (i32, i32) {
    %c0_i32 = arith.constant 0 : i32
    %c0_i32_0 = arith.constant 0 : i32
    return %arg0, %c0_i32 : i32, i32
  }
  func.func @transform_1(%arg0: i32) -> (i32, i32) {
    %c0_i32 = arith.constant 0 : i32
    %c0_i32_0 = arith.constant 0 : i32
    %c0_i32_1 = arith.constant 0 : i32
    return %c0_i32, %c0_i32_0 : i32, i32
  }
  func.func @transform_2(%arg0: i32) -> (i32, i32) {
    %c0_i32 = arith.constant 0 : i32
    %c0_i32_0 = arith.constant 0 : i32
    return %arg0, %c0_i32 : i32, i32
  }
}

</mosaic_0001>

<llo_original>
// kernel: tpu_custom_call.1
$region0: #{tpu_custom_call.1}
  #allocation0 [shape = 'u32[]', space=smem, size = 0x4, offset = 0x4, fixed_abs, tag = 'smem constant byte address 0x4 - core index']
  #allocation1 [shape = 'u32[144,128]{1,0:T(1,128)}', space=vmem, size = 0x12000, scoped, tag = 'internal scratch']
  %s0 = inlined_call_operand.vmem [shape: f32[128,32], index: 0, kind: input, shape index: {}]
  %s1 = inlined_call_operand.vmem [shape: f32[32,128], index: 1, kind: input, shape index: {}]
  %s2 = inlined_call_operand.hbm [shape: f32[128,128], index: 2, kind: output, shape index: {}]
  %s3 = sld [smem:[#allocation0]]
  $region18: #{tpu_custom_call.1} parent=0
    _
  %s5 = ssub.s32 1, %s3
  %s6 = scalar_select 0, %s5, %s3
  $region1: #{tpu_custom_call.1} parent=0
    #allocation2 [shape = 'u8[65536]{0}', space=vmem, size = 0x10000, scoped, tag = 'output window, operand 0, single buffered']
    #allocation3 [shape = 's32[1]{0}', space=sflag, size = 0x4, scoped, tag = 'scoped memory for tpu_custom_call.1']
    %7 = vsyncpa [#allocation3], 0
    // Predicated region
    $region2: #{tpu_custom_call.1} parent=1 // pred_check
      _
    $region3: #{tpu_custom_call.1} parent=1 // pred_check_branch
      %9 = sbr.rel (0) target = $region5
    $region4: #{tpu_custom_call.1} parent=1 // pred_region
      _
    $region5: #{tpu_custom_call.1} parent=1 // pred_fallthru
      _
    // Predicated region
    $region6: #{tpu_custom_call.1} parent=1 // pred_check
      _
    $region7: #{tpu_custom_call.1} parent=1 // pred_check_branch
      %11 = sbr.rel (0) target = $region9
    $region8: #{tpu_custom_call.1} parent=1 // pred_region
      _
    $region9: #{tpu_custom_call.1} parent=1 // pred_fallthru
      _
    %v12 = vld [vmem:[%s0] sm:$0xff]
    %v13 = vld [vmem:[%s0 + $0x8] sm:$0xff]
    %v14 = vld [vmem:[%s0 + $0x10] sm:$0xff]
    %v15 = vld [vmem:[%s0 + $0x18] sm:$0xff]
    %v16 = vld [vmem:[%s0 + $0x20] sm:$0xff]
    %v17 = vld [vmem:[%s0 + $0x28] sm:$0xff]
    %v18 = vld [vmem:[%s0 + $0x30] sm:$0xff]
    %v19 = vld [vmem:[%s0 + $0x38] sm:$0xff]
    %v20 = vld [vmem:[%s0 + $0x40] sm:$0xff]
    %v21 = vld [vmem:[%s0 + $0x48] sm:$0xff]
    %v22 = vld [vmem:[%s0 + $0x50] sm:$0xff]
    %v23 = vld [vmem:[%s0 + $0x58] sm:$0xff]
    %v24 = vld [vmem:[%s0 + $0x60] sm:$0xff]
    %v25 = vld [vmem:[%s0 + $0x68] sm:$0xff]
    %v26 = vld [vmem:[%s0 + $0x70] sm:$0xff]
    %v27 = vld [vmem:[%s0 + $0x78] sm:$0xff]
    %v28 = vld [vmem:[%s1] sm:$0xff]
    %v29 = vld [vmem:[%s1 + $0x8] sm:$0xff]
    %v30 = vld [vmem:[%s1 + $0x10] sm:$0xff]
    %v31 = vld [vmem:[%s1 + $0x18] sm:$0xff]
    %vm32 = vcmask 261120
    %v34 = vsel %vm32, %v12, 0
    %v37 = vsel %vm32, %v13, 0
    %v40 = vsel %vm32, %v14, 0
    %v43 = vsel %vm32, %v15, 0
    %v46 = vsel %vm32, %v16, 0
    %v49 = vsel %vm32, %v17, 0
    %v52 = vsel %vm32, %v18, 0
    %v55 = vsel %vm32, %v19, 0
    %v58 = vsel %vm32, %v20, 0
    %v61 = vsel %vm32, %v21, 0
    %v64 = vsel %vm32, %v22, 0
    %v67 = vsel %vm32, %v23, 0
    %v70 = vsel %vm32, %v24, 0
    %v73 = vsel %vm32, %v25, 0
    %v76 = vsel %vm32, %v26, 0
    %v79 = vsel %vm32, %v27, 0
    %81 = vmatprep.subr.mxu0 0.0
    %82 = vmatpush1.msra.mxu0 %v28
    %83 = vmatprep.subr.mxu0 0.0
    %84 = vmatpush1.msra.mxu0 %v29
    %85 = vmatprep.subr.mxu0 0.0
    %86 = vmatpush1.msra.mxu0 %v30
    %87 = vmatprep.subr.mxu0 0.0
    %88 = vmatpush1.msra.mxu0 %v31
    %89 = vmatprep.subr.mxu0 0.0
    %90 = vmatpush1.msra.mxu0 0.0
    %91 = vmatprep.subr.mxu0 0.0
    %92 = vmatpush1.msra.mxu0 0.0
    %93 = vmatprep.subr.mxu0 0.0
    %94 = vmatpush1.msra.mxu0 0.0
    %95 = vmatprep.subr.mxu0 0.0
    %96 = vmatpush1.msra.mxu0 0.0
    %97 = vmatprep.subr.mxu0 0.0
    %98 = vmatpush1.msra.mxu0 0.0
    %99 = vmatprep.subr.mxu0 0.0
    %100 = vmatpush1.msra.mxu0 0.0
    %101 = vmatprep.subr.mxu0 0.0
    %102 = vmatpush1.msra.mxu0 0.0
    %103 = vmatprep.subr.mxu0 0.0
    %104 = vmatpush1.msra.mxu0 0.0
    %105 = vmatprep.subr.mxu0 0.0
    %106 = vmatpush1.msra.mxu0 0.0
    %107 = vmatprep.subr.mxu0 0.0
    %108 = vmatpush1.msra.mxu0 0.0
    %109 = vmatprep.subr.mxu0 0.0
    %110 = vmatpush1.msra.mxu0 0.0
    %111 = vmatprep.subr.mxu0 0.0
    %112 = vmatpush1.msra.mxu0 0.0
    %113 = vmatprep.subr.mxu0 0.0
    %114 = vmatpush1.msra.mxu0 0.0
    %115 = vmatprep.subr.mxu0 0.0
    %116 = vmatpush1.msra.mxu0 0.0
    %117 = vmatprep.subr.mxu0 0.0
    %118 = vmatpush1.msra.mxu0 0.0
    %119 = vmatprep.subr.mxu0 0.0
    %120 = vmatpush1.msra.mxu0 0.0
    %121 = vmatprep.subr.mxu0 0.0
    %122 = vmatpush1.msra.mxu0 0.0
    %123 = vmatprep.subr.mxu0 0.0
    %124 = vmatpush1.msra.mxu0 0.0
    %125 = vmatprep.subr.mxu0 0.0
    %126 = vmatpush1.msra.mxu0 0.0
    %127 = vmatprep.subr.mxu0 0.0
    %128 = vmatpush1.msra.mxu0 0.0
    %129 = vmatprep.subr.mxu0 0.0
    %130 = vmatpush1.msra.mxu0 0.0
    %131 = vmatprep.subr.mxu0 0.0
    %132 = vmatpush1.msra.mxu0 0.0
    %133 = vmatprep.subr.mxu0 0.0
    %134 = vmatpush1.msra.mxu0 0.0
    %135 = vmatprep.subr.mxu0 0.0
    %136 = vmatpush1.msra.mxu0 0.0
    %137 = vmatprep.subr.mxu0 0.0
    %138 = vmatpush1.msra.mxu0 0.0
    %139 = vmatprep.subr.mxu0 0.0
    %140 = vmatpush1.msra.mxu0 0.0
    %141 = vmatprep.subr.mxu0 0.0
    %142 = vmatpush1.msra.mxu0 0.0
    %143 = vmatprep.subr.mxu0 0.0
    %144 = vmatpush1.msra.mxu0 0.0
    %145 = vmatprep.mubr.f32.mxu0 0.0
    %146 = vmatmul.mubr.f32.gmra.mrb[0].mxu0 %v34
    %v147 = vpop.f32.mrb[0].mxu0
    %v148 = vadd.f32 0.0, %v147
    %v149 = vpop.f32.mrb[0].mxu0
    %150 = vmatprep.mubr.f32.mxu0 0.0
    %151 = vmatmul.mubr.f32.gmra.mrb[0].mxu0 %v37
    %v152 = vpop.f32.mrb[0].mxu0
    %v153 = vadd.f32 0.0, %v152
    %v154 = vpop.f32.mrb[0].mxu0
    %155 = vmatprep.mubr.f32.mxu0 0.0
    %156 = vmatmul.mubr.f32.gmra.mrb[0].mxu0 %v40
    %v157 = vpop.f32.mrb[0].mxu0
    %v158 = vadd.f32 0.0, %v157
    %v159 = vpop.f32.mrb[0].mxu0
    %160 = vmatprep.mubr.f32.mxu0 0.0
    %161 = vmatmul.mubr.f32.gmra.mrb[0].mxu0 %v43
    %v162 = vpop.f32.mrb[0].mxu0
    %v163 = vadd.f32 0.0, %v162
    %v164 = vpop.f32.mrb[0].mxu0
    %165 = vmatprep.mubr.f32.mxu0 0.0
    %166 = vmatmul.mubr.f32.gmra.mrb[0].mxu0 %v46
    %v167 = vpop.f32.mrb[0].mxu0
    %v168 = vadd.f32 0.0, %v167
    %v169 = vpop.f32.mrb[0].mxu0
    %170 = vmatprep.mubr.f32.mxu0 0.0
    %171 = vmatmul.mubr.f32.gmra.mrb[0].mxu0 %v49
    %v172 = vpop.f32.mrb[0].mxu0
    %v173 = vadd.f32 0.0, %v172
    %v174 = vpop.f32.mrb[0].mxu0
    %175 = vmatprep.mubr.f32.mxu0 0.0
    %176 = vmatmul.mubr.f32.gmra.mrb[0].mxu0 %v52
    %v177 = vpop.f32.mrb[0].mxu0
    %v178 = vadd.f32 0.0, %v177
    %v179 = vpop.f32.mrb[0].mxu0
    %180 = vmatprep.mubr.f32.mxu0 0.0
    %181 = vmatmul.mubr.f32.gmra.mrb[0].mxu0 %v55
    %v182 = vpop.f32.mrb[0].mxu0
    %v183 = vadd.f32 0.0, %v182
    %v184 = vpop.f32.mrb[0].mxu0
    %185 = vmatprep.mubr.f32.mxu0 0.0
    %186 = vmatmul.mubr.f32.gmra.mrb[0].mxu0 %v58
    %v187 = vpop.f32.mrb[0].mxu0
    %v188 = vadd.f32 0.0, %v187
    %v189 = vpop.f32.mrb[0].mxu0
    %190 = vmatprep.mubr.f32.mxu0 0.0
    %191 = vmatmul.mubr.f32.gmra.mrb[0].mxu0 %v61
    %v192 = vpop.f32.mrb[0].mxu0
    %v193 = vadd.f32 0.0, %v192
    %v194 = vpop.f32.mrb[0].mxu0
    %195 = vmatprep.mubr.f32.mxu0 0.0
    %196 = vmatmul.mubr.f32.gmra.mrb[0].mxu0 %v64
    %v197 = vpop.f32.mrb[0].mxu0
    %v198 = vadd.f32 0.0, %v197
    %v199 = vpop.f32.mrb[0].mxu0
    %200 = vmatprep.mubr.f32.mxu0 0.0
    %201 = vmatmul.mubr.f32.gmra.mrb[0].mxu0 %v67
    %v202 = vpop.f32.mrb[0].mxu0
    %v203 = vadd.f32 0.0, %v202
    %v204 = vpop.f32.mrb[0].mxu0
    %205 = vmatprep.mubr.f32.mxu0 0.0
    %206 = vmatmul.mubr.f32.gmra.mrb[0].mxu0 %v70
    %v207 = vpop.f32.mrb[0].mxu0
    %v208 = vadd.f32 0.0, %v207
    %v209 = vpop.f32.mrb[0].mxu0
    %210 = vmatprep.mubr.f32.mxu0 0.0
    %211 = vmatmul.mubr.f32.gmra.mrb[0].mxu0 %v73
    %v212 = vpop.f32.mrb[0].mxu0
    %v213 = vadd.f32 0.0, %v212
    %v214 = vpop.f32.mrb[0].mxu0
    %215 = vmatprep.mubr.f32.mxu0 0.0
    %216 = vmatmul.mubr.f32.gmra.mrb[0].mxu0 %v76
    %v217 = vpop.f32.mrb[0].mxu0
    %v218 = vadd.f32 0.0, %v217
    %v219 = vpop.f32.mrb[0].mxu0
    %220 = vmatprep.mubr.f32.mxu0 0.0
    %221 = vmatmul.mubr.f32.gmra.mrb[0].mxu0 %v79
    %v222 = vpop.f32.mrb[0].mxu0
    %v223 = vadd.f32 0.0, %v222
    %v224 = vpop.f32.mrb[0].mxu0
    %225 = vdwg.mxu0
    %v226 = vxor.u32 %v148, 2147483648
    %v227 = vxor.u32 %v153, 2147483648
    %v228 = vxor.u32 %v158, 2147483648
    %v229 = vxor.u32 %v163, 2147483648
    %v230 = vxor.u32 %v168, 2147483648
    %v231 = vxor.u32 %v173, 2147483648
    %v232 = vxor.u32 %v178, 2147483648
    %v233 = vxor.u32 %v183, 2147483648
    %v234 = vxor.u32 %v188, 2147483648
    %v235 = vxor.u32 %v193, 2147483648
    %v236 = vxor.u32 %v198, 2147483648
    %v237 = vxor.u32 %v203, 2147483648
    %v238 = vxor.u32 %v208, 2147483648
    %v239 = vxor.u32 %v213, 2147483648
    %v240 = vxor.u32 %v218, 2147483648
    %v241 = vxor.u32 %v223, 2147483648
    %v242 = vmul.f32 %v226, 1.442695
    %v243 = vpow.pop %v242
    %v244 = vmul.f32 %v227, 1.442695
    %v245 = vpow.pop %v244
    %v246 = vmul.f32 %v228, 1.442695
    %v247 = vpow.pop %v246
    %v248 = vmul.f32 %v229, 1.442695
    %v249 = vpow.pop %v248
    %v250 = vmul.f32 %v230, 1.442695
    %v251 = vpow.pop %v250
    %v252 = vmul.f32 %v231, 1.442695
    %v253 = vpow.pop %v252
    %v254 = vmul.f32 %v232, 1.442695
    %v255 = vpow.pop %v254
    %v256 = vmul.f32 %v233, 1.442695
    %v257 = vpow.pop %v256
    %v258 = vmul.f32 %v234, 1.442695
    %v259 = vpow.pop %v258
    %v260 = vmul.f32 %v235, 1.442695
    %v261 = vpow.pop %v260
    %v262 = vmul.f32 %v236, 1.442695
    %v263 = vpow.pop %v262
    %v264 = vmul.f32 %v237, 1.442695
    %v265 = vpow.pop %v264
    %v266 = vmul.f32 %v238, 1.442695
    %v267 = vpow.pop %v266
    %v268 = vmul.f32 %v239, 1.442695
    %v269 = vpow.pop %v268
    %v270 = vmul.f32 %v240, 1.442695
    %v271 = vpow.pop %v270
    %v272 = vmul.f32 %v241, 1.442695
    %v273 = vpow.pop %v272
    %v274 = vadd.f32 %v243, 1.0
    %v275 = vadd.f32 %v245, 1.0
    %v276 = vadd.f32 %v247, 1.0
    %v277 = vadd.f32 %v249, 1.0
    %v278 = vadd.f32 %v251, 1.0
    %v279 = vadd.f32 %v253, 1.0
    %v280 = vadd.f32 %v255, 1.0
    %v281 = vadd.f32 %v257, 1.0
    %v282 = vadd.f32 %v259, 1.0
    %v283 = vadd.f32 %v261, 1.0
    %v284 = vadd.f32 %v263, 1.0
    %v285 = vadd.f32 %v265, 1.0
    %v286 = vadd.f32 %v267, 1.0
    %v287 = vadd.f32 %v269, 1.0
    %v288 = vadd.f32 %v271, 1.0
    %v289 = vadd.f32 %v273, 1.0
    %v290 = vrcp.pop %v274
    %v291 = vmul.f32 1.0, %v290
    %v292 = vrcp.pop %v275
    %v293 = vmul.f32 1.0, %v292
    %v294 = vrcp.pop %v276
    %v295 = vmul.f32 1.0, %v294
    %v296 = vrcp.pop %v277
    %v297 = vmul.f32 1.0, %v296
    %v298 = vrcp.pop %v278
    %v299 = vmul.f32 1.0, %v298
    %v300 = vrcp.pop %v279
    %v301 = vmul.f32 1.0, %v300
    %v302 = vrcp.pop %v280
    %v303 = vmul.f32 1.0, %v302
    %v304 = vrcp.pop %v281
    %v305 = vmul.f32 1.0, %v304
    %v306 = vrcp.pop %v282
    %v307 = vmul.f32 1.0, %v306
    %v308 = vrcp.pop %v283
    %v309 = vmul.f32 1.0, %v308
    %v310 = vrcp.pop %v284
    %v311 = vmul.f32 1.0, %v310
    %v312 = vrcp.pop %v285
    %v313 = vmul.f32 1.0, %v312
    %v314 = vrcp.pop %v286
    %v315 = vmul.f32 1.0, %v314
    %v316 = vrcp.pop %v287
    %v317 = vmul.f32 1.0, %v316
    %v318 = vrcp.pop %v288
    %v319 = vmul.f32 1.0, %v318
    %v320 = vrcp.pop %v289
    %v321 = vmul.f32 1.0, %v320
    %v322 = vmul.f32 %v148, %v291
    %v323 = vmul.f32 %v153, %v293
    %v324 = vmul.f32 %v158, %v295
    %v325 = vmul.f32 %v163, %v297
    %v326 = vmul.f32 %v168, %v299
    %v327 = vmul.f32 %v173, %v301
    %v328 = vmul.f32 %v178, %v303
    %v329 = vmul.f32 %v183, %v305
    %v330 = vmul.f32 %v188, %v307
    %v331 = vmul.f32 %v193, %v309
    %v332 = vmul.f32 %v198, %v311
    %v333 = vmul.f32 %v203, %v313
    %v334 = vmul.f32 %v208, %v315
    %v335 = vmul.f32 %v213, %v317
    %v336 = vmul.f32 %v218, %v319
    %v337 = vmul.f32 %v223, %v321
    %338 = vst [vmem:[#allocation2] sm:$0xff] %v322
    %339 = vst [vmem:[#allocation2 + $0x8] sm:$0xff] %v323
    %340 = vst [vmem:[#allocation2 + $0x10] sm:$0xff] %v324
    %341 = vst [vmem:[#allocation2 + $0x18] sm:$0xff] %v325
    %342 = vst [vmem:[#allocation2 + $0x20] sm:$0xff] %v326
    %343 = vst [vmem:[#allocation2 + $0x28] sm:$0xff] %v327
    %344 = vst [vmem:[#allocation2 + $0x30] sm:$0xff] %v328
    %345 = vst [vmem:[#allocation2 + $0x38] sm:$0xff] %v329
    %346 = vst [vmem:[#allocation2 + $0x40] sm:$0xff] %v330
    %347 = vst [vmem:[#allocation2 + $0x48] sm:$0xff] %v331
    %348 = vst [vmem:[#allocation2 + $0x50] sm:$0xff] %v332
    %349 = vst [vmem:[#allocation2 + $0x58] sm:$0xff] %v333
    %350 = vst [vmem:[#allocation2 + $0x60] sm:$0xff] %v334
    %351 = vst [vmem:[#allocation2 + $0x68] sm:$0xff] %v335
    %352 = vst [vmem:[#allocation2 + $0x70] sm:$0xff] %v336
    %353 = vst [vmem:[#allocation2 + $0x78] sm:$0xff] %v337
    // Predicated region
    $region10: #{tpu_custom_call.1} parent=1 // pred_check
      _
    $region11: #{tpu_custom_call.1} parent=1 // pred_check_branch
      %355 = sbr.rel (0) target = $region13
    $region12: #{tpu_custom_call.1} parent=1 // pred_region
      %s357 = ssub.s32 2048, 2048
      %358 = vsyncadd [#allocation3], %s357
      %s359 = sshll.u32 [#allocation2], 4
      %s360 = int_to_ptr.vmem [resolvable:$true] %s359
      %365 = dma.vmem_to_hbm [thread:$0]  %s360, 2048, %s2, [#allocation3], 128, 128, 8
    $region13: #{tpu_custom_call.1} parent=1 // pred_fallthru
      _
    // Predicated region
    $region14: #{tpu_custom_call.1} parent=1 // pred_check
      _
    $region15: #{tpu_custom_call.1} parent=1 // pred_check_branch
      %367 = sbr.rel (0) target = $region17
    $region16: #{tpu_custom_call.1} parent=1 // pred_region
      %368 = dma.done [#allocation3], 2048
    $region17: #{tpu_custom_call.1} parent=1 // pred_fallthru
      _
    %369 = vsyncpa [#allocation3], 1

</llo_original>
